<compile_context>
chip_gen: v7x
topology: tpu7x:2x2x1
jax: 0.10.0
libtpu: 0.0.40
codegen_flags: <defaults>
</compile_context>

<pallas_src>
import functools

import jax
import jax.numpy as jnp
from jax.experimental import pallas as pl
from jax.experimental.pallas import tpu as pltpu

IN_DIM = 784
HIDDEN = 24
OUT_DIM = 10
PAD = 128          # lane-dense padded width for hidden / output columns
DEFAULT_BT = 2048  # batch tile (rows); v7x-safe, v5e/v6e comfortable


def _round_up(n, m):
    return ((n + m - 1) // m) * m


def mlp_kernel(x_ref, w1_ref, b1_ref, w2_ref, b2_ref, w3_ref, b3_ref, o_ref):
    # x: (BT, 784) bf16
    x = x_ref[...]

    # fc1 + ReLU -> (BT, 128)   (cols 24..127 are exact zeros)
    h1 = jnp.dot(x, w1_ref[...], preferred_element_type=jnp.float32)
    h1 = jnp.maximum(h1 + b1_ref[...], 0.0)

    # fc2 + ReLU -> (BT, 128)
    h2 = jnp.dot(h1.astype(jnp.bfloat16), w2_ref[...],
                 preferred_element_type=jnp.float32)
    h2 = jnp.maximum(h2 + b2_ref[...], 0.0)

    # fc3 -> (BT, 128)  (only cols 0..9 are meaningful)
    h3 = jnp.dot(h2.astype(jnp.bfloat16), w3_ref[...],
                 preferred_element_type=jnp.float32)
    o_ref[...] = (h3 + b3_ref[...]).astype(o_ref.dtype)


@functools.partial(jax.jit, static_argnames=("block_b",))
def network_forward(x, padded_params, *, block_b=DEFAULT_BT):
    """x: (B, 784). padded_params: output of prepare_params(). Returns (B, 10) f32."""
    B = x.shape[0]
    w1, b1 = padded_params["w1"], padded_params["b1"]
    w2, b2 = padded_params["w2"], padded_params["b2"]
    w3, b3 = padded_params["w3"], padded_params["b3"]

    # Pick a tile that divides the (padded) batch and satisfies the sublane-8 rule.
    bt = min(block_b, _round_up(B, 8))
    b_pad = _round_up(B, bt)
    if b_pad != B:
        x = jnp.pad(x, ((0, b_pad - B), (0, 0)))
    x = x.astype(jnp.bfloat16)

    grid = (b_pad // bt,)

    out = pl.pallas_call(
        mlp_kernel,
        out_shape=jax.ShapeDtypeStruct((b_pad, PAD), jnp.float32),
        grid=grid,
        in_specs=[
            pl.BlockSpec((bt, IN_DIM), lambda i: (i, 0)),      # x: tiled over batch
            pl.BlockSpec((IN_DIM, PAD), lambda i: (0, 0)),     # w1: VMEM-resident
            pl.BlockSpec((1, PAD), lambda i: (0, 0)),          # b1
            pl.BlockSpec((PAD, PAD), lambda i: (0, 0)),        # w2
            pl.BlockSpec((1, PAD), lambda i: (0, 0)),          # b2
            pl.BlockSpec((PAD, PAD), lambda i: (0, 0)),        # w3
            pl.BlockSpec((1, PAD), lambda i: (0, 0)),          # b3
        ],
        out_specs=pl.BlockSpec((bt, PAD), lambda i: (i, 0)),
        compiler_params=pltpu.CompilerParams(
            dimension_semantics=("parallel",),
            vmem_limit_bytes=32 * 1024 * 1024,
        ),
    )(x, w1, b1, w2, b2, w3, b3)

    # Slice away batch padding and the lane-padding of the logits.
    return out[:B, :OUT_DIM]


def init_params(key):
    """Raw params mirroring nn.Linear default init (uniform +/- 1/sqrt(fan_in)).

    Stored as (in_features, out_features) so forward is x @ W + b (== torch F.linear).
    """
    def linear(k, fan_in, fan_out):
        kw, kb = jax.random.split(k)
        bound = 1.0 / jnp.sqrt(fan_in)
        w = jax.random.uniform(kw, (fan_in, fan_out), jnp.float32, -bound, bound)
        b = jax.random.uniform(kb, (1, fan_out), jnp.float32, -bound, bound)
        return w, b

    k1, k2, k3 = jax.random.split(key, 3)
    w1, b1 = linear(k1, IN_DIM, HIDDEN)
    w2, b2 = linear(k2, HIDDEN, HIDDEN)
    w3, b3 = linear(k3, HIDDEN, OUT_DIM)
    return {"w1": w1, "b1": b1, "w2": w2, "b2": b2, "w3": w3, "b3": b3}


def prepare_params(raw):
    """One-time padding/casting: zero-pad hidden/output widths to 128 lanes,
    weights -> bf16 (MXU feed), biases -> f32 (VPU epilogue)."""
    def pad_w(w, rows, cols):
        out = jnp.zeros((rows, cols), jnp.float32)
        out = out.at[: w.shape[0], : w.shape[1]].set(w)
        return out.astype(jnp.bfloat16)

    def pad_b(b, cols):
        out = jnp.zeros((1, cols), jnp.float32)
        return out.at[:, : b.shape[1]].set(b)

    return {
        "w1": pad_w(raw["w1"], IN_DIM, PAD), "b1": pad_b(raw["b1"], PAD),
        "w2": pad_w(raw["w2"], PAD, PAD),    "b2": pad_b(raw["b2"], PAD),
        "w3": pad_w(raw["w3"], PAD, PAD),    "b3": pad_b(raw["b3"], PAD),
    }


def reference_forward_matched(x, raw):
    """Reference with matching bf16-input / f32-accumulate numerics."""
    xb = x.astype(jnp.bfloat16)
    w1 = raw["w1"].astype(jnp.bfloat16)
    w2 = raw["w2"].astype(jnp.bfloat16)
    w3 = raw["w3"].astype(jnp.bfloat16)
    h = jnp.dot(xb, w1, preferred_element_type=jnp.float32) + raw["b1"]
    h = jnp.maximum(h, 0.0)
    h = jnp.dot(h.astype(jnp.bfloat16), w2, preferred_element_type=jnp.float32) + raw["b2"]
    h = jnp.maximum(h, 0.0)
    return jnp.dot(h.astype(jnp.bfloat16), w3, preferred_element_type=jnp.float32) + raw["b3"]


def reference_forward_f32(x, raw):
    h = jnp.maximum(x @ raw["w1"] + raw["b1"], 0.0)
    h = jnp.maximum(h @ raw["w2"] + raw["b2"], 0.0)
    return h @ raw["w3"] + raw["b3"]


if __name__ == "__main__":
    key = jax.random.PRNGKey(0)
    kp, kx = jax.random.split(key)

    raw_params = init_params(kp)
    params = prepare_params(raw_params)

    B = 8
    x = jax.random.normal(kx, (B, IN_DIM), jnp.float32)

    out = network_forward(x, params)
    out = jax.block_until_ready(out)
    assert out.shape == (B, OUT_DIM), out.shape

    ref_matched = reference_forward_matched(x, raw_params)
    ref_f32 = reference_forward_f32(x, raw_params)
    assert jnp.allclose(out, ref_matched, atol=1e-2, rtol=1e-2), \
        "mismatch vs bf16-matched reference"
    assert jnp.allclose(out, ref_f32, atol=5e-2, rtol=5e-2), \
        "mismatch vs f32 reference"

    print("KERNEL_OK")
</pallas_src>

<mosaic_0001>
module attributes {stable_mosaic.version = 11 : i64} {
  func.func @mlp_kernel(%arg0: i32, %arg1: memref<8x784xbf16, #tpu.memory_space<vmem>>, %arg2: memref<784x128xbf16, #tpu.memory_space<vmem>>, %arg3: memref<1x128xf32, #tpu.memory_space<vmem>>, %arg4: memref<128x128xbf16, #tpu.memory_space<vmem>>, %arg5: memref<1x128xf32, #tpu.memory_space<vmem>>, %arg6: memref<128x128xbf16, #tpu.memory_space<vmem>>, %arg7: memref<1x128xf32, #tpu.memory_space<vmem>>, %arg8: memref<8x128xf32, #tpu.memory_space<vmem>>) attributes {dimension_semantics = [#tpu.dimension_semantics<parallel>], iteration_bounds = array<i64: 1>, scalar_prefetch = 0 : i64, scratch_operands = 0 : i64, tpu.core_type = #tpu.core_type<tc>, window_params = [{transform_indices = @transform_0, window_bounds = array<i64: 8, 784>}, {pipeline_mode = #tpu.pipeline_mode<synchronous>, transform_indices = @transform_1, window_bounds = array<i64: 784, 128>}, {pipeline_mode = #tpu.pipeline_mode<synchronous>, transform_indices = @transform_2, window_bounds = array<i64: 1, 128>}, {pipeline_mode = #tpu.pipeline_mode<synchronous>, transform_indices = @transform_3, window_bounds = array<i64: 128, 128>}, {pipeline_mode = #tpu.pipeline_mode<synchronous>, transform_indices = @transform_4, window_bounds = array<i64: 1, 128>}, {pipeline_mode = #tpu.pipeline_mode<synchronous>, transform_indices = @transform_5, window_bounds = array<i64: 128, 128>}, {pipeline_mode = #tpu.pipeline_mode<synchronous>, transform_indices = @transform_6, window_bounds = array<i64: 1, 128>}, {transform_indices = @transform_7, window_bounds = array<i64: 8, 128>}]} {
    %c0 = arith.constant 0 : index
    %c0_0 = arith.constant 0 : index
    %0 = vector.load %arg1[%c0, %c0_0] : memref<8x784xbf16, #tpu.memory_space<vmem>>, vector<8x784xbf16>
    %c0_1 = arith.constant 0 : index
    %c0_2 = arith.constant 0 : index
    %1 = vector.load %arg2[%c0_1, %c0_2] : memref<784x128xbf16, #tpu.memory_space<vmem>>, vector<784x128xbf16>
    %cst = arith.constant dense<0.000000e+00> : vector<8x128xf32>
    %2 = tpu.matmul %0, %1, %cst {dimension_numbers = #tpu.dot_dimension_numbers<[1], [0], [0], [1], [0, 0, 1, 1], [], []>} : vector<8x784xbf16>, vector<784x128xbf16>, vector<8x128xf32> -> vector<8x128xf32>
    %c0_3 = arith.constant 0 : index
    %c0_4 = arith.constant 0 : index
    %3 = vector.load %arg3[%c0_3, %c0_4] : memref<1x128xf32, #tpu.memory_space<vmem>>, vector<1x128xf32>
    %4 = vector.broadcast %3 : vector<1x128xf32> to vector<8x128xf32>
    %5 = arith.addf %2, %4 : vector<8x128xf32>
    %cst_5 = arith.constant 0.000000e+00 : f32
    %6 = vector.broadcast %cst_5 : f32 to vector<8x128xf32>
    %7 = arith.maximumf %5, %6 : vector<8x128xf32>
    %8 = arith.truncf %7 : vector<8x128xf32> to vector<8x128xbf16>
    %c0_6 = arith.constant 0 : index
    %c0_7 = arith.constant 0 : index
    %9 = vector.load %arg4[%c0_6, %c0_7] : memref<128x128xbf16, #tpu.memory_space<vmem>>, vector<128x128xbf16>
    %cst_8 = arith.constant dense<0.000000e+00> : vector<8x128xf32>
    %10 = tpu.matmul %8, %9, %cst_8 {dimension_numbers = #tpu.dot_dimension_numbers<[1], [0], [0], [1], [0, 0, 1, 1], [], []>} : vector<8x128xbf16>, vector<128x128xbf16>, vector<8x128xf32> -> vector<8x128xf32>
    %c0_9 = arith.constant 0 : index
    %c0_10 = arith.constant 0 : index
    %11 = vector.load %arg5[%c0_9, %c0_10] : memref<1x128xf32, #tpu.memory_space<vmem>>, vector<1x128xf32>
    %12 = vector.broadcast %11 : vector<1x128xf32> to vector<8x128xf32>
    %13 = arith.addf %10, %12 : vector<8x128xf32>
    %cst_11 = arith.constant 0.000000e+00 : f32
    %14 = vector.broadcast %cst_11 : f32 to vector<8x128xf32>
    %15 = arith.maximumf %13, %14 : vector<8x128xf32>
    %16 = arith.truncf %15 : vector<8x128xf32> to vector<8x128xbf16>
    %c0_12 = arith.constant 0 : index
    %c0_13 = arith.constant 0 : index
    %17 = vector.load %arg6[%c0_12, %c0_13] : memref<128x128xbf16, #tpu.memory_space<vmem>>, vector<128x128xbf16>
    %cst_14 = arith.constant dense<0.000000e+00> : vector<8x128xf32>
    %18 = tpu.matmul %16, %17, %cst_14 {dimension_numbers = #tpu.dot_dimension_numbers<[1], [0], [0], [1], [0, 0, 1, 1], [], []>} : vector<8x128xbf16>, vector<128x128xbf16>, vector<8x128xf32> -> vector<8x128xf32>
    %c0_15 = arith.constant 0 : index
    %c0_16 = arith.constant 0 : index
    %19 = vector.load %arg7[%c0_15, %c0_16] : memref<1x128xf32, #tpu.memory_space<vmem>>, vector<1x128xf32>
    %20 = vector.broadcast %19 : vector<1x128xf32> to vector<8x128xf32>
    %21 = arith.addf %18, %20 : vector<8x128xf32>
    %c0_17 = arith.constant 0 : index
    %c0_18 = arith.constant 0 : index
    %22 = vector.load %arg8[%c0_17, %c0_18] : memref<8x128xf32, #tpu.memory_space<vmem>>, vector<8x128xf32>
    tpu.vector_store %arg8[%c0_17, %c0_18], %21 {strides = array<i32>} : memref<8x128xf32, #tpu.memory_space<vmem>>, vector<8x128xf32>,
    return
  }
  func.func @transform_0(%arg0: i32) -> (i32, i32) {
    %c0_i32 = arith.constant 0 : i32
    %c0_i32_0 = arith.constant 0 : i32
    return %arg0, %c0_i32 : i32, i32
  }
  func.func @transform_1(%arg0: i32) -> (i32, i32) {
    %c0_i32 = arith.constant 0 : i32
    %c0_i32_0 = arith.constant 0 : i32
    %c0_i32_1 = arith.constant 0 : i32
    return %c0_i32, %c0_i32_0 : i32, i32
  }
  func.func @transform_2(%arg0: i32) -> (i32, i32) {
    %c0_i32 = arith.constant 0 : i32
    %c0_i32_0 = arith.constant 0 : i32
    %c0_i32_1 = arith.constant 0 : i32
    return %c0_i32, %c0_i32_0 : i32, i32
  }
  func.func @transform_3(%arg0: i32) -> (i32, i32) {
    %c0_i32 = arith.constant 0 : i32
    %c0_i32_0 = arith.constant 0 : i32
    %c0_i32_1 = arith.constant 0 : i32
    return %c0_i32, %c0_i32_0 : i32, i32
  }
  func.func @transform_4(%arg0: i32) -> (i32, i32) {
    %c0_i32 = arith.constant 0 : i32
    %c0_i32_0 = arith.constant 0 : i32
    %c0_i32_1 = arith.constant 0 : i32
    return %c0_i32, %c0_i32_0 : i32, i32
  }
  func.func @transform_5(%arg0: i32) -> (i32, i32) {
    %c0_i32 = arith.constant 0 : i32
    %c0_i32_0 = arith.constant 0 : i32
    %c0_i32_1 = arith.constant 0 : i32
    return %c0_i32, %c0_i32_0 : i32, i32
  }
  func.func @transform_6(%arg0: i32) -> (i32, i32) {
    %c0_i32 = arith.constant 0 : i32
    %c0_i32_0 = arith.constant 0 : i32
    %c0_i32_1 = arith.constant 0 : i32
    return %c0_i32, %c0_i32_0 : i32, i32
  }
  func.func @transform_7(%arg0: i32) -> (i32, i32) {
    %c0_i32 = arith.constant 0 : i32
    %c0_i32_0 = arith.constant 0 : i32
    return %arg0, %c0_i32 : i32, i32
  }
}

</mosaic_0001>

<llo_original>
// kernel: network_forward.1
$region0: #{network_forward.1}
  #allocation0 [shape = 'u32[]', space=smem, size = 0x4, offset = 0x4, fixed_abs, tag = 'smem constant byte address 0x4 - core index']
  #allocation1 [shape = 'u32[144,128]{1,0:T(1,128)}', space=vmem, size = 0x12000, scoped, tag = 'internal scratch']
  %s0 = inlined_call_operand.vmem [shape: bf16[8,784], index: 0, kind: input, shape index: {}]
  %s1 = inlined_call_operand.hbm [shape: bf16[784,128], index: 1, kind: input, shape index: {}]
  %s2 = inlined_call_operand.vmem [shape: f32[1,128], index: 2, kind: input, shape index: {}]
  %s3 = inlined_call_operand.vmem [shape: bf16[128,128], index: 3, kind: input, shape index: {}]
  %s4 = inlined_call_operand.vmem [shape: f32[1,128], index: 4, kind: input, shape index: {}]
  %s5 = inlined_call_operand.hbm [shape: bf16[128,128], index: 5, kind: input, shape index: {}]
  %s6 = inlined_call_operand.vmem [shape: f32[1,128], index: 6, kind: input, shape index: {}]
  %s7 = inlined_call_operand.hbm [shape: f32[8,128], index: 7, kind: output, shape index: {}]
  %s8 = sld [smem:[#allocation0]]
  $region46: #{network_forward.1} parent=0
    _
  %s10 = ssub.s32 1, %s8
  %s11 = scalar_select 0, %s10, %s8
  $region1: #{network_forward.1} parent=0
    #allocation2 [shape = 'u8[200704]{0}', space=vmem, size = 0x31000, scoped, tag = 'input window, operand 1, single buffered']
    #allocation3 [shape = 's32[1]{0}', space=sflag, size = 0x4, scoped, tag = 'scoped memory for network_forward.1']
    #allocation4 [shape = 's32[1]{0}', space=sflag, size = 0x4, scoped, tag = 'scoped memory for network_forward.1']
    #allocation5 [shape = 'u8[32768]{0}', space=vmem, size = 0x8000, scoped, tag = 'input window, operand 5, single buffered']
    #allocation6 [shape = 's32[1]{0}', space=sflag, size = 0x4, scoped, tag = 'scoped memory for network_forward.1']
    #allocation7 [shape = 'u8[4096]{0}', space=vmem, size = 0x1000, scoped, tag = 'output window, operand 0, single buffered']
    %12 = vsyncpa [#allocation3], 0
    %13 = vsyncpa [#allocation6], 0
    %14 = vsyncpa [#allocation4], 0
    // Predicated region
    $region2: #{network_forward.1} parent=1 // pred_check
      _
    $region3: #{network_forward.1} parent=1 // pred_check_branch
      %16 = sbr.rel (0) target = $region5
    $region4: #{network_forward.1} parent=1 // pred_region
      _
    $region5: #{network_forward.1} parent=1 // pred_fallthru
      _
    // Predicated region
    $region6: #{network_forward.1} parent=1 // pred_check
      _
    $region7: #{network_forward.1} parent=1 // pred_check_branch
      %18 = sbr.rel (0) target = $region9
    $region8: #{network_forward.1} parent=1 // pred_region
      %s20 = ssub.s32 6272, 6272
      %21 = vsyncadd [#allocation3], %s20
      %s22 = sshll.u32 [#allocation2], 4
      %s23 = int_to_ptr.vmem [resolvable:$true] %s22
      %28 = dma.hbm_to_vmem [thread:$0]  %s1, 6272, %s23, [#allocation3], 64, 64, 4
    $region9: #{network_forward.1} parent=1 // pred_fallthru
      _
    // Predicated region
    $region10: #{network_forward.1} parent=1 // pred_check
      _
    $region11: #{network_forward.1} parent=1 // pred_check_branch
      %30 = sbr.rel (0) target = $region13
    $region12: #{network_forward.1} parent=1 // pred_region
      _
    $region13: #{network_forward.1} parent=1 // pred_fallthru
      _
    // Predicated region
    $region14: #{network_forward.1} parent=1 // pred_check
      _
    $region15: #{network_forward.1} parent=1 // pred_check_branch
      %32 = sbr.rel (0) target = $region17
    $region16: #{network_forward.1} parent=1 // pred_region
      _
    $region17: #{network_forward.1} parent=1 // pred_fallthru
      _
    // Predicated region
    $region18: #{network_forward.1} parent=1 // pred_check
      _
    $region19: #{network_forward.1} parent=1 // pred_check_branch
      %34 = sbr.rel (0) target = $region21
    $region20: #{network_forward.1} parent=1 // pred_region
      _
    $region21: #{network_forward.1} parent=1 // pred_fallthru
      _
    // Predicated region
    $region22: #{network_forward.1} parent=1 // pred_check
      _
    $region23: #{network_forward.1} parent=1 // pred_check_branch
      %36 = sbr.rel (0) target = $region25
    $region24: #{network_forward.1} parent=1 // pred_region
      %s38 = ssub.s32 1024, 1024
      %39 = vsyncadd [#allocation6], %s38
      %s40 = sshll.u32 [#allocation5], 4
      %s41 = int_to_ptr.vmem [resolvable:$true] %s40
      %46 = dma.hbm_to_vmem [thread:$0]  %s5, 1024, %s41, [#allocation6], 64, 64, 4
    $region25: #{network_forward.1} parent=1 // pred_fallthru
      _
    // Predicated region
    $region26: #{network_forward.1} parent=1 // pred_check
      _
    $region27: #{network_forward.1} parent=1 // pred_check_branch
      %48 = sbr.rel (0) target = $region29
    $region28: #{network_forward.1} parent=1 // pred_region
      _
    $region29: #{network_forward.1} parent=1 // pred_fallthru
      _
    // Predicated region
    $region30: #{network_forward.1} parent=1 // pred_check
      _
    $region31: #{network_forward.1} parent=1 // pred_check_branch
      %50 = sbr.rel (0) target = $region33
    $region32: #{network_forward.1} parent=1 // pred_region
      %51 = dma.done [#allocation3], 6272
    $region33: #{network_forward.1} parent=1 // pred_fallthru
      _
    // Predicated region
    $region34: #{network_forward.1} parent=1 // pred_check
      _
    $region35: #{network_forward.1} parent=1 // pred_check_branch
      %53 = sbr.rel (0) target = $region37
    $region36: #{network_forward.1} parent=1 // pred_region
      %54 = dma.done [#allocation6], 1024
    $region37: #{network_forward.1} parent=1 // pred_fallthru
      _
    %v56 = vld [vmem:[%s0] sm:$0xff]
    %v57 = vld [vmem:[%s0 + $0x8] sm:$0xff]
    %v58 = vld [vmem:[%s0 + $0x10] sm:$0xff]
    %v59 = vld [vmem:[%s0 + $0x18] sm:$0xf]
    %v60 = vld [vmem:[#allocation2] sm:$0xf]
    %v61 = vld [vmem:[#allocation2 + $0x4] sm:$0xf]
    %v62 = vld [vmem:[#allocation2 + $0x8] sm:$0xf]
    %v63 = vld [vmem:[#allocation2 + $0xc] sm:$0xf]
    %v64 = vld [vmem:[#allocation2 + $0x10] sm:$0xf]
    %v65 = vld [vmem:[#allocation2 + $0x14] sm:$0xf]
    %v66 = vld [vmem:[#allocation2 + $0x18] sm:$0xf]
    %v67 = vld [vmem:[#allocation2 + $0x1c] sm:$0xf]
    %v68 = vld [vmem:[#allocation2 + $0x20] sm:$0xf]
    %v69 = vld [vmem:[#allocation2 + $0x24] sm:$0xf]
    %v70 = vld [vmem:[#allocation2 + $0x28] sm:$0xf]
    %v71 = vld [vmem:[#allocation2 + $0x2c] sm:$0xf]
    %v72 = vld [vmem:[#allocation2 + $0x30] sm:$0xf]
    %v73 = vld [vmem:[#allocation2 + $0x34] sm:$0xf]
    %v74 = vld [vmem:[#allocation2 + $0x38] sm:$0xf]
    %v75 = vld [vmem:[#allocation2 + $0x3c] sm:$0xf]
    %v76 = vld [vmem:[#allocation2 + $0x40] sm:$0xf]
    %v77 = vld [vmem:[#allocation2 + $0x44] sm:$0xf]
    %v78 = vld [vmem:[#allocation2 + $0x48] sm:$0xf]
    %v79 = vld [vmem:[#allocation2 + $0x4c] sm:$0xf]
    %v80 = vld [vmem:[#allocation2 + $0x50] sm:$0xf]
    %v81 = vld [vmem:[#allocation2 + $0x54] sm:$0xf]
    %v82 = vld [vmem:[#allocation2 + $0x58] sm:$0xf]
    %v83 = vld [vmem:[#allocation2 + $0x5c] sm:$0xf]
    %v84 = vld [vmem:[#allocation2 + $0x60] sm:$0xf]
    %v85 = vld [vmem:[#allocation2 + $0x64] sm:$0xf]
    %v86 = vld [vmem:[#allocation2 + $0x68] sm:$0xf]
    %v87 = vld [vmem:[#allocation2 + $0x6c] sm:$0xf]
    %v88 = vld [vmem:[#allocation2 + $0x70] sm:$0xf]
    %v89 = vld [vmem:[#allocation2 + $0x74] sm:$0xf]
    %v90 = vld [vmem:[#allocation2 + $0x78] sm:$0xf]
    %v91 = vld [vmem:[#allocation2 + $0x7c] sm:$0xf]
    %v92 = vld [vmem:[#allocation2 + $0x80] sm:$0xf]
    %v93 = vld [vmem:[#allocation2 + $0x84] sm:$0xf]
    %v94 = vld [vmem:[#allocation2 + $0x88] sm:$0xf]
    %v95 = vld [vmem:[#allocation2 + $0x8c] sm:$0xf]
    %v96 = vld [vmem:[#allocation2 + $0x90] sm:$0xf]
    %v97 = vld [vmem:[#allocation2 + $0x94] sm:$0xf]
    %v98 = vld [vmem:[#allocation2 + $0x98] sm:$0xf]
    %v99 = vld [vmem:[#allocation2 + $0x9c] sm:$0xf]
    %v100 = vld [vmem:[#allocation2 + $0xa0] sm:$0xf]
    %v101 = vld [vmem:[#allocation2 + $0xa4] sm:$0xf]
    %v102 = vld [vmem:[#allocation2 + $0xa8] sm:$0xf]
    %v103 = vld [vmem:[#allocation2 + $0xac] sm:$0xf]
    %v104 = vld [vmem:[#allocation2 + $0xb0] sm:$0xf]
    %v105 = vld [vmem:[#allocation2 + $0xb4] sm:$0xf]
    %v106 = vld [vmem:[#allocation2 + $0xb8] sm:$0xf]
    %v107 = vld [vmem:[#allocation2 + $0xbc] sm:$0xf]
    %v108 = vld [vmem:[#allocation2 + $0xc0] sm:$0xf]
    %v109 = vld [vmem:[#allocation2 + $0xc4] sm:$0xf]
    %v110 = vld [vmem:[#allocation2 + $0xc8] sm:$0xf]
    %v111 = vld [vmem:[#allocation2 + $0xcc] sm:$0xf]
    %v112 = vld [vmem:[#allocation2 + $0xd0] sm:$0xf]
    %v113 = vld [vmem:[#allocation2 + $0xd4] sm:$0xf]
    %v114 = vld [vmem:[#allocation2 + $0xd8] sm:$0xf]
    %v115 = vld [vmem:[#allocation2 + $0xdc] sm:$0xf]
    %v116 = vld [vmem:[#allocation2 + $0xe0] sm:$0xf]
    %v117 = vld [vmem:[#allocation2 + $0xe4] sm:$0xf]
    %v118 = vld [vmem:[#allocation2 + $0xe8] sm:$0xf]
    %v119 = vld [vmem:[#allocation2 + $0xec] sm:$0xf]
    %v120 = vld [vmem:[#allocation2 + $0xf0] sm:$0xf]
    %v121 = vld [vmem:[#allocation2 + $0xf4] sm:$0xf]
    %v122 = vld [vmem:[#allocation2 + $0xf8] sm:$0xf]
    %v123 = vld [vmem:[#allocation2 + $0xfc] sm:$0xf]
    %v124 = vld [vmem:[#allocation2 + $0x100] sm:$0xf]
    %v125 = vld [vmem:[#allocation2 + $0x104] sm:$0xf]
    %v126 = vld [vmem:[#allocation2 + $0x108] sm:$0xf]
    %v127 = vld [vmem:[#allocation2 + $0x10c] sm:$0xf]
    %v128 = vld [vmem:[#allocation2 + $0x110] sm:$0xf]
    %v129 = vld [vmem:[#allocation2 + $0x114] sm:$0xf]
    %v130 = vld [vmem:[#allocation2 + $0x118] sm:$0xf]
    %v131 = vld [vmem:[#allocation2 + $0x11c] sm:$0xf]
    %v132 = vld [vmem:[#allocation2 + $0x120] sm:$0xf]
    %v133 = vld [vmem:[#allocation2 + $0x124] sm:$0xf]
    %v134 = vld [vmem:[#allocation2 + $0x128] sm:$0xf]
    %v135 = vld [vmem:[#allocation2 + $0x12c] sm:$0xf]
    %v136 = vld [vmem:[#allocation2 + $0x130] sm:$0xf]
    %v137 = vld [vmem:[#allocation2 + $0x134] sm:$0xf]
    %v138 = vld [vmem:[#allocation2 + $0x138] sm:$0xf]
    %v139 = vld [vmem:[#allocation2 + $0x13c] sm:$0xf]
    %v140 = vld [vmem:[#allocation2 + $0x140] sm:$0xf]
    %v141 = vld [vmem:[#allocation2 + $0x144] sm:$0xf]
    %v142 = vld [vmem:[#allocation2 + $0x148] sm:$0xf]
    %v143 = vld [vmem:[#allocation2 + $0x14c] sm:$0xf]
    %v144 = vld [vmem:[#allocation2 + $0x150] sm:$0xf]
    %v145 = vld [vmem:[#allocation2 + $0x154] sm:$0xf]
    %v146 = vld [vmem:[#allocation2 + $0x158] sm:$0xf]
    %v147 = vld [vmem:[#allocation2 + $0x15c] sm:$0xf]
    %v148 = vld [vmem:[#allocation2 + $0x160] sm:$0xf]
    %v149 = vld [vmem:[#allocation2 + $0x164] sm:$0xf]
    %v150 = vld [vmem:[#allocation2 + $0x168] sm:$0xf]
    %v151 = vld [vmem:[#allocation2 + $0x16c] sm:$0xf]
    %v152 = vld [vmem:[#allocation2 + $0x170] sm:$0xf]
    %v153 = vld [vmem:[#allocation2 + $0x174] sm:$0xf]
    %v154 = vld [vmem:[#allocation2 + $0x178] sm:$0xf]
    %v155 = vld [vmem:[#allocation2 + $0x17c] sm:$0xf]
    %v156 = vld [vmem:[#allocation2 + $0x180] sm:$0xf]
    %v157 = vld [vmem:[#allocation2 + $0x184] sm:$0xf]
    %v158 = vld [vmem:[%s2] sm:$0x1]
    %v160 = vlaneseq
    %v161 = vshrl.u32 %v160, 7
    %v162 = vsub.s32 0, %v161
    %v163 = vrot.slane %v158, %v162
    %v169 = vunpack.c.l.b16 %v56
    %v170 = vunpack.c.h.b16 %v56
    %v171 = vunpack.c.l.b16 %v57
    %v172 = vunpack.c.h.b16 %v57
    %v173 = vunpack.c.l.b16 %v58
    %v174 = vunpack.c.h.b16 %v58
    %v175 = vunpack.c.l.b16 %v59
    %v176 = vpack.c.b16 %v169, %v169
    %v177 = vpack.c.b16 %v170, %v170
    %v178 = vpack.c.b16 %v171, %v171
    %v179 = vpack.c.b16 %v172, %v172
    %v180 = vpack.c.b16 %v173, %v173
    %v181 = vpack.c.b16 %v174, %v174
    %v182 = vpack.c.b16 %v175, %v175
    %v287 = vunpack.c.l.b16 %v60
    %v288 = vunpack.c.l.b16 %v61
    %v289 = vunpack.c.l.b16 %v62
    %v290 = vunpack.c.l.b16 %v63
    %v291 = vunpack.c.l.b16 %v64
    %v292 = vunpack.c.l.b16 %v65
    %v293 = vunpack.c.l.b16 %v66
    %v294 = vunpack.c.l.b16 %v67
    %v295 = vunpack.c.l.b16 %v68
    %v296 = vunpack.c.l.b16 %v69
    %v297 = vunpack.c.l.b16 %v70
    %v298 = vunpack.c.l.b16 %v71
    %v299 = vunpack.c.l.b16 %v72
    %v300 = vunpack.c.l.b16 %v73
    %v301 = vunpack.c.l.b16 %v74
    %v302 = vunpack.c.l.b16 %v75
    %v303 = vunpack.c.l.b16 %v76
    %v304 = vunpack.c.l.b16 %v77
    %v305 = vunpack.c.l.b16 %v78
    %v306 = vunpack.c.l.b16 %v79
    %v307 = vunpack.c.l.b16 %v80
    %v308 = vunpack.c.l.b16 %v81
    %v309 = vunpack.c.l.b16 %v82
    %v310 = vunpack.c.l.b16 %v83
    %v311 = vunpack.c.l.b16 %v84
    %v312 = vunpack.c.l.b16 %v85
    %v313 = vunpack.c.l.b16 %v86
    %v314 = vunpack.c.l.b16 %v87
    %v315 = vunpack.c.l.b16 %v88
    %v316 = vunpack.c.l.b16 %v89
    %v317 = vunpack.c.l.b16 %v90
    %v318 = vunpack.c.l.b16 %v91
    %v319 = vunpack.c.l.b16 %v92
    %v320 = vunpack.c.l.b16 %v93
    %v321 = vunpack.c.l.b16 %v94
    %v322 = vunpack.c.l.b16 %v95
    %v323 = vunpack.c.l.b16 %v96
    %v324 = vunpack.c.l.b16 %v97
    %v325 = vunpack.c.l.b16 %v98
    %v326 = vunpack.c.l.b16 %v99
    %v327 = vunpack.c.l.b16 %v100
    %v328 = vunpack.c.l.b16 %v101
    %v329 = vunpack.c.l.b16 %v102
    %v330 = vunpack.c.l.b16 %v103
    %v331 = vunpack.c.l.b16 %v104
    %v332 = vunpack.c.l.b16 %v105
    %v333 = vunpack.c.l.b16 %v106
    %v334 = vunpack.c.l.b16 %v107
    %v335 = vunpack.c.l.b16 %v108
    %v336 = vunpack.c.l.b16 %v109
    %v337 = vunpack.c.l.b16 %v110
    %v338 = vunpack.c.l.b16 %v111
    %v339 = vunpack.c.l.b16 %v112
    %v340 = vunpack.c.l.b16 %v113
    %v341 = vunpack.c.l.b16 %v114
    %v342 = vunpack.c.l.b16 %v115
    %v343 = vunpack.c.l.b16 %v116
    %v344 = vunpack.c.l.b16 %v117
    %v345 = vunpack.c.l.b16 %v118
    %v346 = vunpack.c.l.b16 %v119
    %v347 = vunpack.c.l.b16 %v120
    %v348 = vunpack.c.l.b16 %v121
    %v349 = vunpack.c.l.b16 %v122
    %v350 = vunpack.c.l.b16 %v123
    %v351 = vunpack.c.l.b16 %v124
    %v352 = vunpack.c.l.b16 %v125
    %v353 = vunpack.c.l.b16 %v126
    %v354 = vunpack.c.l.b16 %v127
    %v355 = vunpack.c.l.b16 %v128
    %v356 = vunpack.c.l.b16 %v129
    %v357 = vunpack.c.l.b16 %v130
    %v358 = vunpack.c.l.b16 %v131
    %v359 = vunpack.c.l.b16 %v132
    %v360 = vunpack.c.l.b16 %v133
    %v361 = vunpack.c.l.b16 %v134
    %v362 = vunpack.c.l.b16 %v135
    %v363 = vunpack.c.l.b16 %v136
    %v364 = vunpack.c.l.b16 %v137
    %v365 = vunpack.c.l.b16 %v138
    %v366 = vunpack.c.l.b16 %v139
    %v367 = vunpack.c.l.b16 %v140
    %v368 = vunpack.c.l.b16 %v141
    %v369 = vunpack.c.l.b16 %v142
    %v370 = vunpack.c.l.b16 %v143
    %v371 = vunpack.c.l.b16 %v144
    %v372 = vunpack.c.l.b16 %v145
    %v373 = vunpack.c.l.b16 %v146
    %v374 = vunpack.c.l.b16 %v147
    %v375 = vunpack.c.l.b16 %v148
    %v376 = vunpack.c.l.b16 %v149
    %v377 = vunpack.c.l.b16 %v150
    %v378 = vunpack.c.l.b16 %v151
    %v379 = vunpack.c.l.b16 %v152
    %v380 = vunpack.c.l.b16 %v153
    %v381 = vunpack.c.l.b16 %v154
    %v382 = vunpack.c.l.b16 %v155
    %v383 = vunpack.c.l.b16 %v156
    %v384 = vunpack.c.l.b16 %v157
    %v385 = vpack.c.b16 %v288, %v287
    %v386 = vpack.c.b16 %v290, %v289
    %v387 = vpack.c.b16 %v292, %v291
    %v388 = vpack.c.b16 %v294, %v293
    %v389 = vpack.c.b16 %v296, %v295
    %v390 = vpack.c.b16 %v298, %v297
    %v391 = vpack.c.b16 %v300, %v299
    %v392 = vpack.c.b16 %v302, %v301
    %v393 = vpack.c.b16 %v304, %v303
    %v394 = vpack.c.b16 %v306, %v305
    %v395 = vpack.c.b16 %v308, %v307
    %v396 = vpack.c.b16 %v310, %v309
    %v397 = vpack.c.b16 %v312, %v311
    %v398 = vpack.c.b16 %v314, %v313
    %v399 = vpack.c.b16 %v316, %v315
    %v400 = vpack.c.b16 %v318, %v317
    %v401 = vpack.c.b16 %v320, %v319
    %v402 = vpack.c.b16 %v322, %v321
    %v403 = vpack.c.b16 %v324, %v323
    %v404 = vpack.c.b16 %v326, %v325
    %v405 = vpack.c.b16 %v328, %v327
    %v406 = vpack.c.b16 %v330, %v329
    %v407 = vpack.c.b16 %v332, %v331
    %v408 = vpack.c.b16 %v334, %v333
    %v409 = vpack.c.b16 %v336, %v335
    %v410 = vpack.c.b16 %v338, %v337
    %v411 = vpack.c.b16 %v340, %v339
    %v412 = vpack.c.b16 %v342, %v341
    %v413 = vpack.c.b16 %v344, %v343
    %v414 = vpack.c.b16 %v346, %v345
    %v415 = vpack.c.b16 %v348, %v347
    %v416 = vpack.c.b16 %v350, %v349
    %v417 = vpack.c.b16 %v352, %v351
    %v418 = vpack.c.b16 %v354, %v353
    %v419 = vpack.c.b16 %v356, %v355
    %v420 = vpack.c.b16 %v358, %v357
    %v421 = vpack.c.b16 %v360, %v359
    %v422 = vpack.c.b16 %v362, %v361
    %v423 = vpack.c.b16 %v364, %v363
    %v424 = vpack.c.b16 %v366, %v365
    %v425 = vpack.c.b16 %v368, %v367
    %v426 = vpack.c.b16 %v370, %v369
    %v427 = vpack.c.b16 %v372, %v371
    %v428 = vpack.c.b16 %v374, %v373
    %v429 = vpack.c.b16 %v376, %v375
    %v430 = vpack.c.b16 %v378, %v377
    %v431 = vpack.c.b16 %v380, %v379
    %v432 = vpack.c.b16 %v382, %v381
    %v433 = vpack.c.b16 %v384, %v383
    %vm483 = vcmask 130048
    %v485 = vsel %vm483, %v182, 0
    %487 = vmatprep.subr.bf16.mxu0 0
    %488 = vmatpush1.bf16.msra.mxu0 %v385
    %489 = vmatprep.subr.bf16.mxu0 0
    %490 = vmatpush1.bf16.msra.mxu0 %v386
    %491 = vmatprep.subr.bf16.mxu0 0
    %492 = vmatpush1.bf16.msra.mxu0 %v387
    %493 = vmatprep.subr.bf16.mxu0 0
    %494 = vmatpush1.bf16.msra.mxu0 %v388
    %495 = vmatprep.subr.bf16.mxu0 0
    %496 = vmatpush1.bf16.msra.mxu0 %v389
    %497 = vmatprep.subr.bf16.mxu0 0
    %498 = vmatpush1.bf16.msra.mxu0 %v390
    %499 = vmatprep.subr.bf16.mxu0 0
    %500 = vmatpush1.bf16.msra.mxu0 %v391
    %501 = vmatprep.subr.bf16.mxu0 0
    %502 = vmatpush1.bf16.msra.mxu0 %v392
    %503 = vmatprep.subr.bf16.mxu0 0
    %504 = vmatpush1.bf16.msra.mxu0 %v393
    %505 = vmatprep.subr.bf16.mxu0 0
    %506 = vmatpush1.bf16.msra.mxu0 %v394
    %507 = vmatprep.subr.bf16.mxu0 0
    %508 = vmatpush1.bf16.msra.mxu0 %v395
    %509 = vmatprep.subr.bf16.mxu0 0
    %510 = vmatpush1.bf16.msra.mxu0 %v396
    %511 = vmatprep.subr.bf16.mxu0 0
    %512 = vmatpush1.bf16.msra.mxu0 %v397
    %513 = vmatprep.subr.bf16.mxu0 0
    %514 = vmatpush1.bf16.msra.mxu0 %v398
    %515 = vmatprep.subr.bf16.mxu0 0
    %516 = vmatpush1.bf16.msra.mxu0 %v399
    %517 = vmatprep.subr.bf16.mxu0 0
    %518 = vmatpush1.bf16.msra.mxu0 %v400
    %519 = vmatprep.mubr.bf16.mxu0 %v177
    %520 = vmatmul.mubr.bf16.gmra.mrb[0].mxu0 %v176
    %v521 = vpop.f32.mrb[0].mxu0
    %v522 = vadd.f32 %v163, %v521
    %v523 = vpop.f32.mrb[0].mxu0
    %v524 = vpop.f32.mrb[0].mxu0
    %v525 = vpop.f32.mrb[0].mxu0
    %526 = vdwg.mxu0
    %527 = vmatprep.subr.bf16.mxu0 0
    %528 = vmatpush1.bf16.msra.mxu0 %v401
    %529 = vmatprep.subr.bf16.mxu0 0
    %530 = vmatpush1.bf16.msra.mxu0 %v402
    %531 = vmatprep.subr.bf16.mxu0 0
    %532 = vmatpush1.bf16.msra.mxu0 %v403
    %533 = vmatprep.subr.bf16.mxu0 0
    %534 = vmatpush1.bf16.msra.mxu0 %v404
    %535 = vmatprep.subr.bf16.mxu0 0
    %536 = vmatpush1.bf16.msra.mxu0 %v405
    %537 = vmatprep.subr.bf16.mxu0 0
    %538 = vmatpush1.bf16.msra.mxu0 %v406
    %539 = vmatprep.subr.bf16.mxu0 0
    %540 = vmatpush1.bf16.msra.mxu0 %v407
    %541 = vmatprep.subr.bf16.mxu0 0
    %542 = vmatpush1.bf16.msra.mxu0 %v408
    %543 = vmatprep.subr.bf16.mxu0 0
    %544 = vmatpush1.bf16.msra.mxu0 %v409
    %545 = vmatprep.subr.bf16.mxu0 0
    %546 = vmatpush1.bf16.msra.mxu0 %v410
    %547 = vmatprep.subr.bf16.mxu0 0
    %548 = vmatpush1.bf16.msra.mxu0 %v411
    %549 = vmatprep.subr.bf16.mxu0 0
    %550 = vmatpush1.bf16.msra.mxu0 %v412
    %551 = vmatprep.subr.bf16.mxu0 0
    %552 = vmatpush1.bf16.msra.mxu0 %v413
    %553 = vmatprep.subr.bf16.mxu0 0
    %554 = vmatpush1.bf16.msra.mxu0 %v414
    %555 = vmatprep.subr.bf16.mxu0 0
    %556 = vmatpush1.bf16.msra.mxu0 %v415
    %557 = vmatprep.subr.bf16.mxu0 0
    %558 = vmatpush1.bf16.msra.mxu0 %v416
    %559 = vmatprep.mubr.bf16.mxu0 %v179
    %560 = vmatmul.mubr.bf16.gmra.mrb[0].mxu0 %v178
    %v561 = vpop.f32.mrb[0].mxu0
    %v562 = vadd.f32 %v522, %v561
    %v563 = vpop.f32.mrb[0].mxu0
    %v564 = vpop.f32.mrb[0].mxu0
    %v565 = vpop.f32.mrb[0].mxu0
    %566 = vdwg.mxu0
    %567 = vmatprep.subr.bf16.mxu0 0
    %568 = vmatpush1.bf16.msra.mxu0 %v417
    %569 = vmatprep.subr.bf16.mxu0 0
    %570 = vmatpush1.bf16.msra.mxu0 %v418
    %571 = vmatprep.subr.bf16.mxu0 0
    %572 = vmatpush1.bf16.msra.mxu0 %v419
    %573 = vmatprep.subr.bf16.mxu0 0
    %574 = vmatpush1.bf16.msra.mxu0 %v420
    %575 = vmatprep.subr.bf16.mxu0 0
    %576 = vmatpush1.bf16.msra.mxu0 %v421
    %577 = vmatprep.subr.bf16.mxu0 0
    %578 = vmatpush1.bf16.msra.mxu0 %v422
    %579 = vmatprep.subr.bf16.mxu0 0
    %580 = vmatpush1.bf16.msra.mxu0 %v423
    %581 = vmatprep.subr.bf16.mxu0 0
    %582 = vmatpush1.bf16.msra.mxu0 %v424
    %583 = vmatprep.subr.bf16.mxu0 0
    %584 = vmatpush1.bf16.msra.mxu0 %v425
    %585 = vmatprep.subr.bf16.mxu0 0
    %586 = vmatpush1.bf16.msra.mxu0 %v426
    %587 = vmatprep.subr.bf16.mxu0 0
    %588 = vmatpush1.bf16.msra.mxu0 %v427
    %589 = vmatprep.subr.bf16.mxu0 0
    %590 = vmatpush1.bf16.msra.mxu0 %v428
    %591 = vmatprep.subr.bf16.mxu0 0
    %592 = vmatpush1.bf16.msra.mxu0 %v429
    %593 = vmatprep.subr.bf16.mxu0 0
    %594 = vmatpush1.bf16.msra.mxu0 %v430
    %595 = vmatprep.subr.bf16.mxu0 0
    %596 = vmatpush1.bf16.msra.mxu0 %v431
    %597 = vmatprep.subr.bf16.mxu0 0
    %598 = vmatpush1.bf16.msra.mxu0 %v432
    %599 = vmatprep.mubr.bf16.mxu0 %v181
    %600 = vmatmul.mubr.bf16.gmra.mrb[0].mxu0 %v180
    %v601 = vpop.f32.mrb[0].mxu0
    %v602 = vadd.f32 %v562, %v601
    %v603 = vpop.f32.mrb[0].mxu0
    %v604 = vpop.f32.mrb[0].mxu0
    %v605 = vpop.f32.mrb[0].mxu0
    %606 = vdwg.mxu0
    %607 = vmatprep.subr.bf16.mxu0 0
    %608 = vmatpush1.bf16.msra.mxu0 %v433
    %609 = vmatprep.subr.bf16.mxu0 0
    %610 = vmatpush1.bf16.msra.mxu0 0
    %611 = vmatprep.subr.bf16.mxu0 0
    %612 = vmatpush1.bf16.msra.mxu0 0
    %613 = vmatprep.subr.bf16.mxu0 0
    %614 = vmatpush1.bf16.msra.mxu0 0
    %615 = vmatprep.subr.bf16.mxu0 0
    %616 = vmatpush1.bf16.msra.mxu0 0
    %617 = vmatprep.subr.bf16.mxu0 0
    %618 = vmatpush1.bf16.msra.mxu0 0
    %619 = vmatprep.subr.bf16.mxu0 0
    %620 = vmatpush1.bf16.msra.mxu0 0
    %621 = vmatprep.subr.bf16.mxu0 0
    %622 = vmatpush1.bf16.msra.mxu0 0
    %623 = vmatprep.subr.bf16.mxu0 0
    %624 = vmatpush1.bf16.msra.mxu0 0
    %625 = vmatprep.subr.bf16.mxu0 0
    %626 = vmatpush1.bf16.msra.mxu0 0
    %627 = vmatprep.subr.bf16.mxu0 0
    %628 = vmatpush1.bf16.msra.mxu0 0
    %629 = vmatprep.subr.bf16.mxu0 0
    %630 = vmatpush1.bf16.msra.mxu0 0
    %631 = vmatprep.subr.bf16.mxu0 0
    %632 = vmatpush1.bf16.msra.mxu0 0
    %633 = vmatprep.subr.bf16.mxu0 0
    %634 = vmatpush1.bf16.msra.mxu0 0
    %635 = vmatprep.subr.bf16.mxu0 0
    %636 = vmatpush1.bf16.msra.mxu0 0
    %637 = vmatprep.subr.bf16.mxu0 0
    %638 = vmatpush1.bf16.msra.mxu0 0
    %639 = vmatprep.mubr.bf16.mxu0 0
    %640 = vmatmul.mubr.bf16.gmra.mrb[0].mxu0 %v485
    %v641 = vpop.f32.mrb[0].mxu0
    %v642 = vadd.f32 %v602, %v641
    %v643 = vpop.f32.mrb[0].mxu0
    %v644 = vpop.f32.mrb[0].mxu0
    %v645 = vpop.f32.mrb[0].mxu0
    %646 = vdwg.mxu0
    %v647 = vmax.f32 %v642, 0.0
    %v648 = vpack.c.bf16 %v647, %v647
    %v649 = vld [vmem:[%s3] sm:$0xf]
    %v650 = vld [vmem:[%s3 + $0x4] sm:$0xf]
    %v651 = vld [vmem:[%s3 + $0x8] sm:$0xf]
    %v652 = vld [vmem:[%s3 + $0xc] sm:$0xf]
    %v653 = vld [vmem:[%s3 + $0x10] sm:$0xf]
    %v654 = vld [vmem:[%s3 + $0x14] sm:$0xf]
    %v655 = vld [vmem:[%s3 + $0x18] sm:$0xf]
    %v656 = vld [vmem:[%s3 + $0x1c] sm:$0xf]
    %v657 = vld [vmem:[%s3 + $0x20] sm:$0xf]
    %v658 = vld [vmem:[%s3 + $0x24] sm:$0xf]
    %v659 = vld [vmem:[%s3 + $0x28] sm:$0xf]
    %v660 = vld [vmem:[%s3 + $0x2c] sm:$0xf]
    %v661 = vld [vmem:[%s3 + $0x30] sm:$0xf]
    %v662 = vld [vmem:[%s3 + $0x34] sm:$0xf]
    %v663 = vld [vmem:[%s3 + $0x38] sm:$0xf]
    %v664 = vld [vmem:[%s3 + $0x3c] sm:$0xf]
    %v665 = vld [vmem:[%s4] sm:$0x1]
    %v667 = vlaneseq
    %v668 = vshrl.u32 %v667, 7
    %v669 = vsub.s32 0, %v668
    %v670 = vrot.slane %v665, %v669
    %v688 = vunpack.c.l.b16 %v649
    %v689 = vunpack.c.l.b16 %v650
    %v690 = vunpack.c.l.b16 %v651
    %v691 = vunpack.c.l.b16 %v652
    %v692 = vunpack.c.l.b16 %v653
    %v693 = vunpack.c.l.b16 %v654
    %v694 = vunpack.c.l.b16 %v655
    %v695 = vunpack.c.l.b16 %v656
    %v696 = vunpack.c.l.b16 %v657
    %v697 = vunpack.c.l.b16 %v658
    %v698 = vunpack.c.l.b16 %v659
    %v699 = vunpack.c.l.b16 %v660
    %v700 = vunpack.c.l.b16 %v661
    %v701 = vunpack.c.l.b16 %v662
    %v702 = vunpack.c.l.b16 %v663
    %v703 = vunpack.c.l.b16 %v664
    %v704 = vpack.c.b16 %v689, %v688
    %v705 = vpack.c.b16 %v691, %v690
    %v706 = vpack.c.b16 %v693, %v692
    %v707 = vpack.c.b16 %v695, %v694
    %v708 = vpack.c.b16 %v697, %v696
    %v709 = vpack.c.b16 %v699, %v698
    %v710 = vpack.c.b16 %v701, %v700
    %v711 = vpack.c.b16 %v703, %v702
    %720 = vmatprep.subr.bf16.mxu0 0
    %721 = vmatpush1.bf16.msra.mxu0 %v704
    %722 = vmatprep.subr.bf16.mxu0 0
    %723 = vmatpush1.bf16.msra.mxu0 %v705
    %724 = vmatprep.subr.bf16.mxu0 0
    %725 = vmatpush1.bf16.msra.mxu0 %v706
    %726 = vmatprep.subr.bf16.mxu0 0
    %727 = vmatpush1.bf16.msra.mxu0 %v707
    %728 = vmatprep.subr.bf16.mxu0 0
    %729 = vmatpush1.bf16.msra.mxu0 %v708
    %730 = vmatprep.subr.bf16.mxu0 0
    %731 = vmatpush1.bf16.msra.mxu0 %v709
    %732 = vmatprep.subr.bf16.mxu0 0
    %733 = vmatpush1.bf16.msra.mxu0 %v710
    %734 = vmatprep.subr.bf16.mxu0 0
    %735 = vmatpush1.bf16.msra.mxu0 %v711
    %736 = vmatprep.subr.bf16.mxu0 0
    %737 = vmatpush1.bf16.msra.mxu0 0
    %738 = vmatprep.subr.bf16.mxu0 0
    %739 = vmatpush1.bf16.msra.mxu0 0
    %740 = vmatprep.subr.bf16.mxu0 0
    %741 = vmatpush1.bf16.msra.mxu0 0
    %742 = vmatprep.subr.bf16.mxu0 0
    %743 = vmatpush1.bf16.msra.mxu0 0
    %744 = vmatprep.subr.bf16.mxu0 0
    %745 = vmatpush1.bf16.msra.mxu0 0
    %746 = vmatprep.subr.bf16.mxu0 0
    %747 = vmatpush1.bf16.msra.mxu0 0
    %748 = vmatprep.subr.bf16.mxu0 0
    %749 = vmatpush1.bf16.msra.mxu0 0
    %750 = vmatprep.subr.bf16.mxu0 0
    %751 = vmatpush1.bf16.msra.mxu0 0
    %752 = vmatprep.mubr.bf16.mxu0 0
    %753 = vmatmul.mubr.bf16.gmra.mrb[0].mxu0 %v648
    %v754 = vpop.f32.mrb[0].mxu0
    %v755 = vadd.f32 %v670, %v754
    %v756 = vpop.f32.mrb[0].mxu0
    %v757 = vpop.f32.mrb[0].mxu0
    %v758 = vpop.f32.mrb[0].mxu0
    %759 = vdwg.mxu0
    %v760 = vmax.f32 %v755, 0.0
    %v761 = vpack.c.bf16 %v760, %v760
    %v762 = vld [vmem:[#allocation5] sm:$0xf]
    %v763 = vld [vmem:[#allocation5 + $0x4] sm:$0xf]
    %v764 = vld [vmem:[#allocation5 + $0x8] sm:$0xf]
    %v765 = vld [vmem:[#allocation5 + $0xc] sm:$0xf]
    %v766 = vld [vmem:[#allocation5 + $0x10] sm:$0xf]
    %v767 = vld [vmem:[#allocation5 + $0x14] sm:$0xf]
    %v768 = vld [vmem:[#allocation5 + $0x18] sm:$0xf]
    %v769 = vld [vmem:[#allocation5 + $0x1c] sm:$0xf]
    %v770 = vld [vmem:[#allocation5 + $0x20] sm:$0xf]
    %v771 = vld [vmem:[#allocation5 + $0x24] sm:$0xf]
    %v772 = vld [vmem:[#allocation5 + $0x28] sm:$0xf]
    %v773 = vld [vmem:[#allocation5 + $0x2c] sm:$0xf]
    %v774 = vld [vmem:[#allocation5 + $0x30] sm:$0xf]
    %v775 = vld [vmem:[#allocation5 + $0x34] sm:$0xf]
    %v776 = vld [vmem:[#allocation5 + $0x38] sm:$0xf]
    %v777 = vld [vmem:[#allocation5 + $0x3c] sm:$0xf]
    %v778 = vld [vmem:[%s6] sm:$0x1]
    %v780 = vlaneseq
    %v781 = vshrl.u32 %v780, 7
    %v782 = vsub.s32 0, %v781
    %v783 = vrot.slane %v778, %v782
    %v801 = vunpack.c.l.b16 %v762
    %v802 = vunpack.c.l.b16 %v763
    %v803 = vunpack.c.l.b16 %v764
    %v804 = vunpack.c.l.b16 %v765
    %v805 = vunpack.c.l.b16 %v766
    %v806 = vunpack.c.l.b16 %v767
    %v807 = vunpack.c.l.b16 %v768
    %v808 = vunpack.c.l.b16 %v769
    %v809 = vunpack.c.l.b16 %v770
    %v810 = vunpack.c.l.b16 %v771
    %v811 = vunpack.c.l.b16 %v772
    %v812 = vunpack.c.l.b16 %v773
    %v813 = vunpack.c.l.b16 %v774
    %v814 = vunpack.c.l.b16 %v775
    %v815 = vunpack.c.l.b16 %v776
    %v816 = vunpack.c.l.b16 %v777
    %v817 = vpack.c.b16 %v802, %v801
    %v818 = vpack.c.b16 %v804, %v803
    %v819 = vpack.c.b16 %v806, %v805
    %v820 = vpack.c.b16 %v808, %v807
    %v821 = vpack.c.b16 %v810, %v809
    %v822 = vpack.c.b16 %v812, %v811
    %v823 = vpack.c.b16 %v814, %v813
    %v824 = vpack.c.b16 %v816, %v815
    %833 = vmatprep.subr.bf16.mxu0 0
    %834 = vmatpush1.bf16.msra.mxu0 %v817
    %835 = vmatprep.subr.bf16.mxu0 0
    %836 = vmatpush1.bf16.msra.mxu0 %v818
    %837 = vmatprep.subr.bf16.mxu0 0
    %838 = vmatpush1.bf16.msra.mxu0 %v819
    %839 = vmatprep.subr.bf16.mxu0 0
    %840 = vmatpush1.bf16.msra.mxu0 %v820
    %841 = vmatprep.subr.bf16.mxu0 0
    %842 = vmatpush1.bf16.msra.mxu0 %v821
    %843 = vmatprep.subr.bf16.mxu0 0
    %844 = vmatpush1.bf16.msra.mxu0 %v822
    %845 = vmatprep.subr.bf16.mxu0 0
    %846 = vmatpush1.bf16.msra.mxu0 %v823
    %847 = vmatprep.subr.bf16.mxu0 0
    %848 = vmatpush1.bf16.msra.mxu0 %v824
    %849 = vmatprep.subr.bf16.mxu0 0
    %850 = vmatpush1.bf16.msra.mxu0 0
    %851 = vmatprep.subr.bf16.mxu0 0
    %852 = vmatpush1.bf16.msra.mxu0 0
    %853 = vmatprep.subr.bf16.mxu0 0
    %854 = vmatpush1.bf16.msra.mxu0 0
    %855 = vmatprep.subr.bf16.mxu0 0
    %856 = vmatpush1.bf16.msra.mxu0 0
    %857 = vmatprep.subr.bf16.mxu0 0
    %858 = vmatpush1.bf16.msra.mxu0 0
    %859 = vmatprep.subr.bf16.mxu0 0
    %860 = vmatpush1.bf16.msra.mxu0 0
    %861 = vmatprep.subr.bf16.mxu0 0
    %862 = vmatpush1.bf16.msra.mxu0 0
    %863 = vmatprep.subr.bf16.mxu0 0
    %864 = vmatpush1.bf16.msra.mxu0 0
    %865 = vmatprep.mubr.bf16.mxu0 0
    %866 = vmatmul.mubr.bf16.gmra.mrb[0].mxu0 %v761
    %v867 = vpop.f32.mrb[0].mxu0
    %v868 = vadd.f32 %v783, %v867
    %v869 = vpop.f32.mrb[0].mxu0
    %v870 = vpop.f32.mrb[0].mxu0
    %v871 = vpop.f32.mrb[0].mxu0
    %872 = vdwg.mxu0
    %873 = vst [vmem:[#allocation7] sm:$0xff] %v868
    // Predicated region
    $region38: #{network_forward.1} parent=1 // pred_check
      _
    $region39: #{network_forward.1} parent=1 // pred_check_branch
      %875 = sbr.rel (0) target = $region41
    $region40: #{network_forward.1} parent=1 // pred_region
      %s877 = ssub.s32 128, 128
      %878 = vsyncadd [#allocation4], %s877
      %s880 = sshll.u32 [#allocation7], 4
      %s881 = int_to_ptr.vmem [resolvable:$true] %s880
      %883 = dma.vmem_to_hbm [thread:$0]  %s881, 128, %s7, [#allocation4]
    $region41: #{network_forward.1} parent=1 // pred_fallthru
      _
    // Predicated region
    $region42: #{network_forward.1} parent=1 // pred_check
      _
    $region43: #{network_forward.1} parent=1 // pred_check_branch
      %885 = sbr.rel (0) target = $region45
    $region44: #{network_forward.1} parent=1 // pred_region
      %886 = dma.done [#allocation4], 128
    $region45: #{network_forward.1} parent=1 // pred_fallthru
      _
    %887 = vsyncpa [#allocation3], 1
    %888 = vsyncpa [#allocation6], 1
    %889 = vsyncpa [#allocation4], 1

</llo_original>
